<compile_context>
chip_gen: v5e
topology: v5e:2x2
jax: 0.10.0
libtpu: 0.0.40
codegen_flags: <defaults>
</compile_context>

<pallas_src>
import functools

import jax
import jax.numpy as jnp
from jax import lax
from jax.experimental import pallas as pl
from jax.experimental.pallas import tpu as pltpu

EPS = 1e-3            # matches the PyTorch module default (eps=0.001)
LANES = 128
SUBLANES = 8
STRIP_ROWS = 512      # rows folded per inner step -> <=256 KiB f32 temporaries
MAX_SHARDS = 2        # v7x has 2 TensorCores; harmless serial loop on v5e/v6e

_VMEM_CONFIG = None


def _vmem_config():
    """Return (double-buffered input-window budget, vmem_limit_bytes)."""
    global _VMEM_CONFIG
    if _VMEM_CONFIG is None:
        phys = 64 << 20                        # conservative default = v7x size
        try:
            phys = int(getattr(pltpu.get_tpu_info(), "vmem_capacity_bytes",
                               phys)) or phys
        except Exception:
            pass
        # <= half of physical VMEM for the 2x double-buffered input windows,
        # capped at 32 MiB (8 MiB/input/buffer at f32) -- past that the
        # per-step DMA-overhead amortization has flattened out.
        in_budget = min(phys // 2, 32 << 20)
        vmem_limit = min((phys * 3) // 4, in_budget + (16 << 20))
        _VMEM_CONFIG = (in_budget, vmem_limit)
    return _VMEM_CONFIG


def _min_sublane_tile(dtype):
    """Minimum second-minor tile for a dtype: 8 (4B), 16 (2B), 32 (1B)."""
    return max(SUBLANES, 32 // max(1, jnp.dtype(dtype).itemsize))


def _pick_strip_rows(block_rows, tile):
    """Largest strip (<=512) that is a multiple of the dtype tile and divides
    block_rows, so strip starts stay packed-sublane aligned."""
    for cand in (512, 256, 128, 64, 32, 16, 8):
        if cand <= block_rows and cand % tile == 0 and block_rows % cand == 0:
            return cand
    return block_rows


def _charbonnier_block_kernel(x_ref, y_ref, acc_ref, *, strip_rows, n_strips):
    """Fold one (block_rows, 128) tile into this shard's (8, 128) accumulator."""

    @pl.when(pl.program_id(1) == 0)
    def _():
        acc_ref[...] = jnp.zeros_like(acc_ref)

    eps2 = jnp.float32(EPS * EPS)

    def strip_sum(row_start):
        xs = x_ref[pl.ds(row_start, strip_rows), :].astype(jnp.float32)
        ys = y_ref[pl.ds(row_start, strip_rows), :].astype(jnp.float32)
        d = xs - ys
        v = jnp.sqrt(d * d + eps2)
        # (strip, 128) -> (strip//8, 8, 128); the axis-0 sum is vreg-wise VPU
        # adds (no cross-lane XLU reduce), and bounds temporaries to the strip.
        return jnp.sum(v.reshape(strip_rows // SUBLANES, SUBLANES, LANES), axis=0)

    if n_strips <= 4:
        acc = jnp.zeros((SUBLANES, LANES), jnp.float32)
        for k in range(n_strips):                  # tiny, fully unrolled
            acc = acc + strip_sum(k * strip_rows)
    else:
        acc = lax.fori_loop(
            0, n_strips,
            lambda k, a: a + strip_sum(pl.multiple_of(k * strip_rows, strip_rows)),
            jnp.zeros((SUBLANES, LANES), jnp.float32))

    acc_ref[...] += acc


def _charbonnier_main_sum(x2d, y2d, block_rows, num_shards, steps_per_shard, tile):
    """Sum sqrt(diff^2 + eps^2) over the first rows_used rows of x2d / y2d."""
    strip_rows = _pick_strip_rows(block_rows, tile)
    n_strips = block_rows // strip_rows
    n_main = block_rows * LANES * num_shards * steps_per_shard
    bytes_in = (x2d.dtype.itemsize + y2d.dtype.itemsize) * n_main
    _, vmem_limit = _vmem_config()

    kernel = functools.partial(_charbonnier_block_kernel,
                               strip_rows=strip_rows, n_strips=n_strips)

    acc = pl.pallas_call(
        kernel,
        out_shape=jax.ShapeDtypeStruct((num_shards, SUBLANES, LANES), jnp.float32),
        grid_spec=pltpu.PrefetchScalarGridSpec(
            num_scalar_prefetch=0,
            grid=(num_shards, steps_per_shard),
            in_specs=[
                pl.BlockSpec((block_rows, LANES),
                             lambda s, i: (s * steps_per_shard + i, 0)),
                pl.BlockSpec((block_rows, LANES),
                             lambda s, i: (s * steps_per_shard + i, 0)),
            ],
            # Per-shard accumulator block, resident across the reduction axis.
            out_specs=pl.BlockSpec((None, SUBLANES, LANES),
                                   lambda s, i: (s, 0, 0)),
        ),
        compiler_params=pltpu.CompilerParams(
            # TODO(synk): confirm on v7x (xprof per-core timeline) that the
            # size-2 "parallel" axis lands on both TensorCores; if not, switch
            # to pltpu.CORE_PARALLEL / pl.core_map.
            dimension_semantics=("parallel", "arbitrary"),
            vmem_limit_bytes=vmem_limit,
        ),
        cost_estimate=pl.CostEstimate(
            flops=4 * n_main,
            transcendentals=n_main,
            bytes_accessed=bytes_in + num_shards * SUBLANES * LANES * 4,
        ),
    )(x2d, y2d)
    # Single final scalar reduce (once, outside the grid loop).
    return jnp.sum(acc)


def charbonnier_loss(x, y):
    """Pallas implementation of CharbonnierLoss_.forward (reduction='mean')."""
    assert x.shape == y.shape, "x and y must have the same shape"
    n_true = x.size
    eps2 = jnp.float32(EPS * EPS)

    xf = x.reshape(-1)
    yf = y.reshape(-1)

    tile = max(_min_sublane_tile(x.dtype), _min_sublane_tile(y.dtype))
    in_budget, _ = _vmem_config()
    bytes_per_row = LANES * (jnp.dtype(x.dtype).itemsize +
                             jnp.dtype(y.dtype).itemsize)
    target_rows = max(STRIP_ROWS,
                      (in_budget // (2 * bytes_per_row)) // STRIP_ROWS * STRIP_ROWS)

    n_lane_rows = n_true // LANES
    block_rows = min(target_rows, (n_lane_rows // tile) * tile)
    if block_rows >= STRIP_ROWS:
        block_rows = (block_rows // STRIP_ROWS) * STRIP_ROWS

    main_sum = jnp.float32(0.0)
    n_main = 0
    if block_rows >= tile:
        steps_total = n_lane_rows // block_rows
        # Use both TensorCores only when it does not leave a whole block to
        # the un-pipelined XLA tail for medium-sized inputs.
        if steps_total >= MAX_SHARDS and (
                steps_total % MAX_SHARDS == 0 or steps_total >= 4 * MAX_SHARDS):
            num_shards = MAX_SHARDS
        else:
            num_shards = 1
        steps_per_shard = steps_total // num_shards
        rows_used = num_shards * steps_per_shard * block_rows
        n_main = rows_used * LANES

        if n_true == n_lane_rows * LANES:
            # Free bitcast reshape: no extra HBM traffic.
            x2d = xf.reshape(n_lane_rows, LANES)
            y2d = yf.reshape(n_lane_rows, LANES)
        else:
            # Rare path (element count not a multiple of 128): the prefix
            # slice+reshape materializes a copy of the prefix before the
            # kernel.  Accepted & documented -- it only triggers for shapes
            # whose total size is not a multiple of 128.
            x2d = xf[: n_lane_rows * LANES].reshape(n_lane_rows, LANES)
            y2d = yf[: n_lane_rows * LANES].reshape(n_lane_rows, LANES)

        main_sum = _charbonnier_main_sum(
            x2d, y2d, block_rows, num_shards, steps_per_shard, tile)

    # Tail not covered by whole blocks: plain JAX (small).
    if n_main < n_true:
        dt = xf[n_main:].astype(jnp.float32) - yf[n_main:].astype(jnp.float32)
        tail_sum = jnp.sum(jnp.sqrt(dt * dt + eps2))
    else:
        tail_sum = jnp.float32(0.0)

    return (main_sum + tail_sum) / jnp.float32(n_true)


if __name__ == "__main__":
    key = jax.random.PRNGKey(0)

    def _check(shape, k):
        kx, ky = jax.random.split(k)
        x = jax.random.normal(kx, shape, dtype=jnp.float32)
        y = jax.random.normal(ky, shape, dtype=jnp.float32)
        loss = jax.block_until_ready(charbonnier_loss(x, y))
        diff = x - y
        ref = jnp.mean(jnp.sqrt(diff * diff + jnp.float32(EPS * EPS)))
        assert jnp.allclose(loss, ref, rtol=1e-5, atol=1e-6), (shape, loss, ref)

    k1, k2 = jax.random.split(key)
    # Small NCHW shapes consistent with an image-restoration loss.
    _check((2, 4, 16, 16), k1)   # size multiple of 128 (main kernel path)
    _check((2, 3, 65, 67), k2)   # size not a multiple of 128 (tail path)

    print("KERNEL_OK")
</pallas_src>

<mosaic_0001>
module attributes {stable_mosaic.version = 11 : i64} {
  func.func @_charbonnier_block_kernel(%arg0: i32, %arg1: i32, %arg2: memref<16x128xf32, #tpu.memory_space<vmem>>, %arg3: memref<16x128xf32, #tpu.memory_space<vmem>>, %arg4: memref<1x8x128xf32, #tpu.memory_space<vmem>>) attributes {dimension_semantics = [#tpu.dimension_semantics<parallel>, #tpu.dimension_semantics<arbitrary>], iteration_bounds = array<i64: 1, 1>, scalar_prefetch = 0 : i64, scratch_operands = 0 : i64, tpu.core_type = #tpu.core_type<tc>, window_params = [{transform_indices = @transform_0, window_bounds = array<i64: 16, 128>}, {transform_indices = @transform_1, window_bounds = array<i64: 16, 128>}, {transform_indices = @transform_2, window_bounds = array<i64: 1, 8, 128>}]} {
    %c0_i32 = arith.constant 0 : i32
    %0 = arith.cmpi eq, %arg1, %c0_i32 : i32
    %1 = arith.extui %0 : i1 to i32
    %c0_i32_0 = arith.constant 0 : i32
    %2 = arith.cmpi ne, %1, %c0_i32_0 : i32
    scf.if %2 {
      %cst_12 = arith.constant 0.000000e+00 : f32
      %20 = vector.broadcast %cst_12 : f32 to vector<8x128xf32>
      %c0_13 = arith.constant 0 : index
      %c0_14 = arith.constant 0 : index
      %c0_15 = arith.constant 0 : index
      %21 = vector.load %arg4[%c0_13, %c0_14, %c0_15] : memref<1x8x128xf32, #tpu.memory_space<vmem>>, vector<1x8x128xf32>
      %22 = vector.shape_cast %21 : vector<1x8x128xf32> to vector<8x128xf32>
      %23 = vector.shape_cast %20 : vector<8x128xf32> to vector<1x8x128xf32>
      tpu.vector_store %arg4[%c0_13, %c0_14, %c0_15], %23 {strides = array<i32>} : memref<1x8x128xf32, #tpu.memory_space<vmem>>, vector<1x8x128xf32>,
    } else {
    }
    %cst = arith.constant 0.000000e+00 : f32
    %3 = vector.broadcast %cst : f32 to vector<8x128xf32>
    %c0 = arith.constant 0 : index
    %c0_1 = arith.constant 0 : index
    %4 = vector.load %arg2[%c0, %c0_1] : memref<16x128xf32, #tpu.memory_space<vmem>>, vector<16x128xf32>
    %c0_2 = arith.constant 0 : index
    %c0_3 = arith.constant 0 : index
    %5 = vector.load %arg3[%c0_2, %c0_3] : memref<16x128xf32, #tpu.memory_space<vmem>>, vector<16x128xf32>
    %6 = arith.subf %4, %5 : vector<16x128xf32>
    %7 = arith.mulf %6, %6 : vector<16x128xf32>
    %cst_4 = arith.constant 9.99999997E-7 : f32
    %8 = vector.broadcast %cst_4 : f32 to vector<16x128xf32>
    %9 = arith.addf %7, %8 : vector<16x128xf32>
    %10 = math.sqrt %9 : vector<16x128xf32>
    %11 = vector.shape_cast %10 : vector<16x128xf32> to vector<2x8x128xf32>
    %cst_5 = arith.constant dense<0.000000e+00> : vector<8x128xf32>
    %12 = vector.multi_reduction <add>, %11, %cst_5 [0] : vector<2x8x128xf32> to vector<8x128xf32>
    %13 = arith.addf %3, %12 : vector<8x128xf32>
    %c0_6 = arith.constant 0 : index
    %c0_7 = arith.constant 0 : index
    %c0_8 = arith.constant 0 : index
    %14 = vector.load %arg4[%c0_6, %c0_7, %c0_8] : memref<1x8x128xf32, #tpu.memory_space<vmem>>, vector<1x8x128xf32>
    %15 = vector.shape_cast %14 : vector<1x8x128xf32> to vector<8x128xf32>
    %16 = arith.addf %15, %13 : vector<8x128xf32>
    %c0_9 = arith.constant 0 : index
    %c0_10 = arith.constant 0 : index
    %c0_11 = arith.constant 0 : index
    %17 = vector.load %arg4[%c0_9, %c0_10, %c0_11] : memref<1x8x128xf32, #tpu.memory_space<vmem>>, vector<1x8x128xf32>
    %18 = vector.shape_cast %17 : vector<1x8x128xf32> to vector<8x128xf32>
    %19 = vector.shape_cast %16 : vector<8x128xf32> to vector<1x8x128xf32>
    tpu.vector_store %arg4[%c0_9, %c0_10, %c0_11], %19 {strides = array<i32>} : memref<1x8x128xf32, #tpu.memory_space<vmem>>, vector<1x8x128xf32>,
    return
  }
  func.func @transform_0(%arg0: i32, %arg1: i32) -> (i32, i32) {
    %c1_i32 = arith.constant 1 : i32
    %0 = arith.muli %arg0, %c1_i32 : i32
    %1 = arith.addi %0, %arg1 : i32
    %c0_i32 = arith.constant 0 : i32
    %c0_i32_0 = arith.constant 0 : i32
    return %1, %c0_i32 : i32, i32
  }
  func.func @transform_1(%arg0: i32, %arg1: i32) -> (i32, i32) {
    %c1_i32 = arith.constant 1 : i32
    %0 = arith.muli %arg0, %c1_i32 : i32
    %1 = arith.addi %0, %arg1 : i32
    %c0_i32 = arith.constant 0 : i32
    %c0_i32_0 = arith.constant 0 : i32
    return %1, %c0_i32 : i32, i32
  }
  func.func @transform_2(%arg0: i32, %arg1: i32) -> (i32, i32, i32) {
    %c0_i32 = arith.constant 0 : i32
    %c0_i32_0 = arith.constant 0 : i32
    %c0_i32_1 = arith.constant 0 : i32
    return %arg0, %c0_i32, %c0_i32_0 : i32, i32, i32
  }
}

</mosaic_0001>

<llo_original>
// kernel: tpu_custom_call.1
$region0: #{tpu_custom_call.1}
  #allocation0 [shape = 'u32[]', space=smem, size = 0x4, offset = 0x4, fixed_abs, tag = 'smem constant byte address 0x4 - core index']
  #allocation1 [shape = 'u32[72,128]{1,0:T(1,128)}', space=vmem, size = 0x9000, scoped, tag = 'internal scratch']
  %s0 = inlined_call_operand.hbm [shape: f32[16,128], index: 0, kind: input, shape index: {}]
  %s1 = inlined_call_operand.hbm [shape: f32[16,128], index: 1, kind: input, shape index: {}]
  %s2 = inlined_call_operand.hbm [shape: f32[1,8,128], index: 2, kind: output, shape index: {}]
  %s3 = sld [smem:[#allocation0]]
  $region30: #{tpu_custom_call.1} parent=0
    _
  %s5 = ssub.s32 1, %s3
  %s6 = scalar_select 0, %s5, %s3
  $region1: #{tpu_custom_call.1} parent=0
    #allocation2 [shape = 'u8[8192]{0}', space=vmem, size = 0x2000, scoped, tag = 'input window, operand 0, single buffered']
    #allocation3 [shape = 's32[1]{0}', space=sflag, size = 0x4, scoped, tag = 'scoped memory for tpu_custom_call.1']
    #allocation4 [shape = 's32[1]{0}', space=sflag, size = 0x4, scoped, tag = 'scoped memory for tpu_custom_call.1']
    #allocation5 [shape = 'u8[8192]{0}', space=vmem, size = 0x2000, scoped, tag = 'input window, operand 1, single buffered']
    #allocation6 [shape = 's32[1]{0}', space=sflag, size = 0x4, scoped, tag = 'scoped memory for tpu_custom_call.1']
    #allocation7 [shape = 'u8[4096]{0}', space=vmem, size = 0x1000, scoped, tag = 'output window, operand 0, single buffered']
    %7 = vsyncpa [#allocation3], 0
    %8 = vsyncpa [#allocation6], 0
    %9 = vsyncpa [#allocation4], 0
    // Predicated region
    $region2: #{tpu_custom_call.1} parent=1 // pred_check
      _
    $region3: #{tpu_custom_call.1} parent=1 // pred_check_branch
      %11 = sbr.rel (0) target = $region5
    $region4: #{tpu_custom_call.1} parent=1 // pred_region
      %s12 = sadd.s32 0, 0
      %s13 = smul.u32 2, %s12
      %15 = vsyncadd [#allocation3], 0
      %s16 = smul.addr %s13, 8
      %s17 = scalar_lea.hbm %s0, %s16
      %s18 = sshll.u32 %s17, 4
      %s19 = int_to_ptr.hbm [resolvable:$true] %s18
      %s20 = sshll.u32 [#allocation2], 4
      %s21 = int_to_ptr.vmem [resolvable:$true] %s20
      %26 = dma.hbm_to_vmem [thread:$0]  %s19, 256, %s21, [#allocation3], 128, 128, 8
    $region5: #{tpu_custom_call.1} parent=1 // pred_fallthru
      _
    // Predicated region
    $region6: #{tpu_custom_call.1} parent=1 // pred_check
      _
    $region7: #{tpu_custom_call.1} parent=1 // pred_check_branch
      %28 = sbr.rel (0) target = $region9
    $region8: #{tpu_custom_call.1} parent=1 // pred_region
      %s29 = sadd.s32 0, 0
      %s30 = smul.u32 2, %s29
      %32 = vsyncadd [#allocation6], 0
      %s33 = smul.addr %s30, 8
      %s34 = scalar_lea.hbm %s1, %s33
      %s35 = sshll.u32 %s34, 4
      %s36 = int_to_ptr.hbm [resolvable:$true] %s35
      %s37 = sshll.u32 [#allocation5], 4
      %s38 = int_to_ptr.vmem [resolvable:$true] %s37
      %43 = dma.hbm_to_vmem [thread:$0]  %s36, 256, %s38, [#allocation6], 128, 128, 8
    $region9: #{tpu_custom_call.1} parent=1 // pred_fallthru
      _
    // Predicated region
    $region10: #{tpu_custom_call.1} parent=1 // pred_check
      _
    $region11: #{tpu_custom_call.1} parent=1 // pred_check_branch
      %45 = sbr.rel (0) target = $region13
    $region12: #{tpu_custom_call.1} parent=1 // pred_region
      %47 = dma.done [#allocation3], 256
    $region13: #{tpu_custom_call.1} parent=1 // pred_fallthru
      _
    // Predicated region
    $region14: #{tpu_custom_call.1} parent=1 // pred_check
      _
    $region15: #{tpu_custom_call.1} parent=1 // pred_check_branch
      %49 = sbr.rel (0) target = $region17
    $region16: #{tpu_custom_call.1} parent=1 // pred_region
      %51 = dma.done [#allocation6], 256
    $region17: #{tpu_custom_call.1} parent=1 // pred_fallthru
      _
    %s52 = sadd.s32 0, 0
    %s53 = smul.u32 2, %s52
    %s54 = sadd.s32 0, 0
    %s55 = smul.u32 2, %s54
    %p56 = scmp.eq.s32.totalorder 0, 0
    // Predicated region
    $region18: #{tpu_custom_call.1} parent=1 // pred_check
      %p57 = pneg %p56
    $region19: #{tpu_custom_call.1} parent=1 // pred_check_branch
      %59 = sbr.rel (%p57) target = $region21
    $region20: #{tpu_custom_call.1} parent=1 // pred_region
      %60 = vst [vmem:[#allocation7] sm:$0xff] 0.0
    $region21: #{tpu_custom_call.1} parent=1 // pred_fallthru
      _
    %v61 = vld [vmem:[#allocation2] sm:$0xff]
    %v62 = vld [vmem:[#allocation2 + $0x8] sm:$0xff]
    %v63 = vld [vmem:[#allocation5] sm:$0xff]
    %v64 = vld [vmem:[#allocation5 + $0x8] sm:$0xff]
    %v65 = vsub.f32 %v61, %v63
    %v66 = vsub.f32 %v62, %v64
    %v67 = vmul.f32 %v65, %v65
    %v68 = vmul.f32 %v66, %v66
    %v69 = vadd.f32 %v67, 1e-06
    %v70 = vadd.f32 %v68, 1e-06
    %v71 = vrsqrt.pop %v69
    %v72 = vmul.f32 %v71, %v69
    %v73 = vmul.f32 %v72, %v71
    %v74 = vmul.f32 0.5, %v73
    %v75 = vsub.f32 1.5, %v74
    %v76 = vmul.f32 %v71, %v75
    %v77 = vmul.f32 %v69, %v76
    %vm78 = vcmp.eq.f32.partialorder %v69, inf
    %v79 = vsel %vm78, %v69, %v77
    %vm80 = vcmp.eq.f32.partialorder %v69, 0.0
    %v81 = vand.u32 %v69, 2147483648
    %v82 = vsel %vm80, %v81, %v79
    %v83 = vrsqrt.pop %v70
    %v84 = vmul.f32 %v83, %v70
    %v85 = vmul.f32 %v84, %v83
    %v86 = vmul.f32 0.5, %v85
    %v87 = vsub.f32 1.5, %v86
    %v88 = vmul.f32 %v83, %v87
    %v89 = vmul.f32 %v70, %v88
    %vm90 = vcmp.eq.f32.partialorder %v70, inf
    %v91 = vsel %vm90, %v70, %v89
    %vm92 = vcmp.eq.f32.partialorder %v70, 0.0
    %v93 = vand.u32 %v70, 2147483648
    %v94 = vsel %vm92, %v93, %v91
    %v95 = vadd.f32 %v82, %v94
    %v96 = vadd.f32 %v95, 0.0
    %v97 = vld [vmem:[#allocation7] sm:$0xff]
    %v98 = vadd.f32 %v97, %v96
    %99 = vst [vmem:[#allocation7] sm:$0xff] %v98
    // Predicated region
    $region22: #{tpu_custom_call.1} parent=1 // pred_check
      _
    $region23: #{tpu_custom_call.1} parent=1 // pred_check_branch
      %101 = sbr.rel (0) target = $region25
    $region24: #{tpu_custom_call.1} parent=1 // pred_region
      %103 = vsyncadd [#allocation4], 0
      %s105 = sshll.u32 [#allocation7], 4
      %s106 = int_to_ptr.vmem [resolvable:$true] %s105
      %s107 = sshll.u32 %s2, 4
      %s108 = int_to_ptr.hbm [resolvable:$true] %s107
      %110 = dma.vmem_to_hbm [thread:$0]  %s106, 128, %s108, [#allocation4]
    $region25: #{tpu_custom_call.1} parent=1 // pred_fallthru
      _
    // Predicated region
    $region26: #{tpu_custom_call.1} parent=1 // pred_check
      _
    $region27: #{tpu_custom_call.1} parent=1 // pred_check_branch
      %112 = sbr.rel (0) target = $region29
    $region28: #{tpu_custom_call.1} parent=1 // pred_region
      %114 = dma.done [#allocation4], 128
    $region29: #{tpu_custom_call.1} parent=1 // pred_fallthru
      _
    %115 = vsyncpa [#allocation3], 1
    %116 = vsyncpa [#allocation6], 1
    %117 = vsyncpa [#allocation4], 1

</llo_original>
